<compile_context>
chip_gen: v7x
topology: tpu7x:2x2x1
jax: 0.10.0
libtpu: 0.0.40
codegen_flags: <defaults>
</compile_context>

<pallas_src>
import jax
import jax.numpy as jnp
from jax.experimental import pallas as pl
from jax.experimental.pallas import tpu as pltpu

# Raw PyTorch layer widths; hidden widths are zero-padded to 128 lanes so the
# three hidden matmuls and their bias/LeakyReLU epilogues stay lane-dense.
D_IN_RAW = 28 * 28          # 784  (used as-is: full-dim block, Mosaic pads K)
D_H1 = 128                  # already aligned
D_H2_RAW, D_H2 = 64, 128
D_H3_RAW, D_H3 = 32, 128
D_OUT_RAW, D_OUT_PAD = 1, 128


def _leaky_relu(v, slope=0.2):
    return jnp.where(v > 0, v, slope * v)


def discriminator_kernel(x_ref,
                         w1_ref, b1_ref,
                         w2_ref, b2_ref,
                         w3_ref, b3_ref,
                         w4_ref, b4_ref,
                         o_ref):
    # Cast the raw f32 pixels to bf16 in-kernel (input DMA stays f32, but no
    # separate wrapper pass).  4 bf16 MXU matmuls with f32 accumulation;
    # bias + LeakyReLU on the VPU in f32.
    x = x_ref[...].astype(jnp.bfloat16)
    h = jnp.dot(x, w1_ref[...], preferred_element_type=jnp.float32) + b1_ref[...]
    h = _leaky_relu(h).astype(jnp.bfloat16)
    h = jnp.dot(h, w2_ref[...], preferred_element_type=jnp.float32) + b2_ref[...]
    h = _leaky_relu(h).astype(jnp.bfloat16)
    h = jnp.dot(h, w3_ref[...], preferred_element_type=jnp.float32) + b3_ref[...]
    h = _leaky_relu(h).astype(jnp.bfloat16)
    logits = jnp.dot(h, w4_ref[...], preferred_element_type=jnp.float32) + b4_ref[...]
    # Store only the single real output column; (tm, 1) masked store is cheap
    # and avoids a 128x-padded output DMA.
    o_ref[...] = logits[:, :D_OUT_RAW].astype(o_ref.dtype)


def _pad2d(a, rows, cols, dtype):
    """Zero-pad a 2-D array to (rows, cols) and cast.  Padding is exactly 0."""
    out = jnp.zeros((rows, cols), dtype)
    return out.at[:a.shape[0], :a.shape[1]].set(a.astype(dtype))


def prepare_params(params):
    """One-time prep (hoist out of the forward path): pad weights/biases to
    lane-aligned shapes; weights -> bf16, biases -> f32."""
    (w1, b1), (w2, b2), (w3, b3), (w4, b4) = params
    return (
        _pad2d(w1, D_IN_RAW, D_H1, jnp.bfloat16), _pad2d(b1, 1, D_H1, jnp.float32),
        _pad2d(w2, D_H1, D_H2, jnp.bfloat16),     _pad2d(b2, 1, D_H2, jnp.float32),
        _pad2d(w3, D_H2, D_H3, jnp.bfloat16),     _pad2d(b3, 1, D_H3, jnp.float32),
        _pad2d(w4, D_H3, D_OUT_PAD, jnp.bfloat16), _pad2d(b4, 1, D_OUT_PAD, jnp.float32),
    )


def _select_tm(B):
    """Batch tile selection:
       - small batches: round up to a multiple of 16 (bf16 sublane packing);
       - large batches: multiple of 256 up to 2048, capped so the grid keeps
         >= 2 steps (lets v7x's second TensorCore shard the "parallel" axis)."""
    if B <= 512:
        return min(256, max(16, -(-B // 16) * 16))
    half = -(-B // 2)
    tm = max(256, (half // 256) * 256)
    return min(2048, tm)


def discriminator_forward(x_nchw, padded_params, *, tm=None):
    """x_nchw: (B, 1, 28, 28) float32 -> (B, 1) float32.
    `padded_params` must come from prepare_params (call once, reuse)."""
    B = x_nchw.shape[0]
    # nn.Flatten semantics (row-major over C,H,W).  Stays f32; cast in-kernel.
    x2d = x_nchw.reshape(B, -1)

    if tm is None:
        tm = _select_tm(B)
    b_pad = -(-B // tm) * tm
    if b_pad != B:
        # Only pad batch rows (zeros), and only when needed.
        x2d = jnp.pad(x2d, ((0, b_pad - B), (0, 0)))

    w1, b1, w2, b2, w3, b3, w4, b4 = padded_params

    const = lambda shape: pl.BlockSpec(shape, lambda i: (0, 0))  # VMEM-resident

    out = pl.pallas_call(
        discriminator_kernel,
        out_shape=jax.ShapeDtypeStruct((b_pad, D_OUT_RAW), jnp.float32),
        grid=(b_pad // tm,),
        in_specs=[
            pl.BlockSpec((tm, D_IN_RAW), lambda i: (i, 0)),   # batch-tiled input
            const(w1.shape), const(b1.shape),
            const(w2.shape), const(b2.shape),
            const(w3.shape), const(b3.shape),
            const(w4.shape), const(b4.shape),
        ],
        out_specs=pl.BlockSpec((tm, D_OUT_RAW), lambda i: (i, 0)),
        compiler_params=pltpu.CompilerParams(
            dimension_semantics=("parallel",),   # shard batch across TCs (v7x)
        ),
    )(x2d, w1, b1, w2, b2, w3, b3, w4, b4)

    return out if b_pad == B else out[:B]


def init_params(key):
    """Mimic nn.Linear default init: U(-1/sqrt(fan_in), 1/sqrt(fan_in)).
    Weights stored as (in_features, out_features)."""
    dims = [(D_IN_RAW, D_H1), (D_H1, D_H2_RAW), (D_H2_RAW, D_H3_RAW),
            (D_H3_RAW, D_OUT_RAW)]
    params = []
    for fan_in, fan_out in dims:
        key, kw, kb = jax.random.split(key, 3)
        bound = 1.0 / (fan_in ** 0.5)
        w = jax.random.uniform(kw, (fan_in, fan_out), jnp.float32, -bound, bound)
        b = jax.random.uniform(kb, (1, fan_out), jnp.float32, -bound, bound)
        params.append((w, b))
    return params


def reference_forward_bf16(x_nchw, params):
    """Pure-JAX reference matching the kernel's numerics (bf16 matmul inputs,
    f32 accumulation, bf16 intermediates)."""
    x = x_nchw.reshape(x_nchw.shape[0], -1).astype(jnp.bfloat16)

    def layer(h, w, b, act):
        y = jnp.dot(h, w.astype(jnp.bfloat16),
                    preferred_element_type=jnp.float32) + b
        return _leaky_relu(y).astype(jnp.bfloat16) if act else y

    (w1, b1), (w2, b2), (w3, b3), (w4, b4) = params
    h = layer(x, w1, b1, True)
    h = layer(h, w2, b2, True)
    h = layer(h, w3, b3, True)
    return layer(h, w4, b4, False)


def reference_forward_f32(x_nchw, params):
    x = x_nchw.reshape(x_nchw.shape[0], -1)
    (w1, b1), (w2, b2), (w3, b3), (w4, b4) = params
    h = _leaky_relu(x @ w1 + b1)
    h = _leaky_relu(h @ w2 + b2)
    h = _leaky_relu(h @ w3 + b3)
    return h @ w4 + b4


if __name__ == "__main__":
    key = jax.random.PRNGKey(0)
    kx, kp = jax.random.split(key)
    B = 8
    x = jax.random.normal(kx, (B, 1, 28, 28), jnp.float32)   # NCHW like PyTorch
    params = init_params(kp)

    # One-time weight prep (padded + bf16); reuse across forward calls.
    padded_params = jax.tree_util.tree_map(jax.block_until_ready,
                                           prepare_params(params))

    out = discriminator_forward(x, padded_params)
    out = jax.block_until_ready(out)

    assert out.shape == (B, 1), out.shape

    ref_bf16 = reference_forward_bf16(x, params)
    assert jnp.allclose(out, ref_bf16, atol=1e-2, rtol=1e-2), \
        "mismatch vs bf16-matched JAX reference"

    ref_f32 = reference_forward_f32(x, params)
    assert jnp.allclose(out, ref_f32, atol=5e-2, rtol=5e-2), \
        "mismatch vs f32 JAX reference"

    print("KERNEL_OK")
</pallas_src>

<mosaic_0001>
module attributes {stable_mosaic.version = 11 : i64} {
  func.func @discriminator_kernel(%arg0: i32, %arg1: memref<16x784xf32, #tpu.memory_space<vmem>>, %arg2: memref<784x128xbf16, #tpu.memory_space<vmem>>, %arg3: memref<1x128xf32, #tpu.memory_space<vmem>>, %arg4: memref<128x128xbf16, #tpu.memory_space<vmem>>, %arg5: memref<1x128xf32, #tpu.memory_space<vmem>>, %arg6: memref<128x128xbf16, #tpu.memory_space<vmem>>, %arg7: memref<1x128xf32, #tpu.memory_space<vmem>>, %arg8: memref<128x128xbf16, #tpu.memory_space<vmem>>, %arg9: memref<1x128xf32, #tpu.memory_space<vmem>>, %arg10: memref<16x1xf32, #tpu.memory_space<vmem>>) attributes {dimension_semantics = [#tpu.dimension_semantics<parallel>], iteration_bounds = array<i64: 1>, scalar_prefetch = 0 : i64, scratch_operands = 0 : i64, tpu.core_type = #tpu.core_type<tc>, window_params = [{transform_indices = @transform_0, window_bounds = array<i64: 16, 784>}, {pipeline_mode = #tpu.pipeline_mode<synchronous>, transform_indices = @transform_1, window_bounds = array<i64: 784, 128>}, {pipeline_mode = #tpu.pipeline_mode<synchronous>, transform_indices = @transform_2, window_bounds = array<i64: 1, 128>}, {pipeline_mode = #tpu.pipeline_mode<synchronous>, transform_indices = @transform_3, window_bounds = array<i64: 128, 128>}, {pipeline_mode = #tpu.pipeline_mode<synchronous>, transform_indices = @transform_4, window_bounds = array<i64: 1, 128>}, {pipeline_mode = #tpu.pipeline_mode<synchronous>, transform_indices = @transform_5, window_bounds = array<i64: 128, 128>}, {pipeline_mode = #tpu.pipeline_mode<synchronous>, transform_indices = @transform_6, window_bounds = array<i64: 1, 128>}, {pipeline_mode = #tpu.pipeline_mode<synchronous>, transform_indices = @transform_7, window_bounds = array<i64: 128, 128>}, {pipeline_mode = #tpu.pipeline_mode<synchronous>, transform_indices = @transform_8, window_bounds = array<i64: 1, 128>}, {transform_indices = @transform_9, window_bounds = array<i64: 16, 1>}]} {
    %c0 = arith.constant 0 : index
    %c0_0 = arith.constant 0 : index
    %0 = vector.load %arg1[%c0, %c0_0] : memref<16x784xf32, #tpu.memory_space<vmem>>, vector<16x784xf32>
    %1 = arith.truncf %0 : vector<16x784xf32> to vector<16x784xbf16>
    %c0_1 = arith.constant 0 : index
    %c0_2 = arith.constant 0 : index
    %2 = vector.load %arg2[%c0_1, %c0_2] : memref<784x128xbf16, #tpu.memory_space<vmem>>, vector<784x128xbf16>
    %cst = arith.constant dense<0.000000e+00> : vector<16x128xf32>
    %3 = tpu.matmul %1, %2, %cst {dimension_numbers = #tpu.dot_dimension_numbers<[1], [0], [0], [1], [0, 0, 1, 1], [], []>} : vector<16x784xbf16>, vector<784x128xbf16>, vector<16x128xf32> -> vector<16x128xf32>
    %c0_3 = arith.constant 0 : index
    %c0_4 = arith.constant 0 : index
    %4 = vector.load %arg3[%c0_3, %c0_4] : memref<1x128xf32, #tpu.memory_space<vmem>>, vector<1x128xf32>
    %5 = vector.broadcast %4 : vector<1x128xf32> to vector<16x128xf32>
    %6 = arith.addf %3, %5 : vector<16x128xf32>
    %cst_5 = arith.constant 0.000000e+00 : f32
    %7 = vector.broadcast %cst_5 : f32 to vector<16x128xf32>
    %8 = arith.cmpf ogt, %6, %7 : vector<16x128xf32>
    %cst_6 = arith.constant 2.000000e-01 : f32
    %9 = vector.broadcast %cst_6 : f32 to vector<16x128xf32>
    %10 = arith.mulf %9, %6 : vector<16x128xf32>
    %11 = arith.select %8, %6, %10 : vector<16x128xi1>, vector<16x128xf32>
    %12 = arith.truncf %11 : vector<16x128xf32> to vector<16x128xbf16>
    %c0_7 = arith.constant 0 : index
    %c0_8 = arith.constant 0 : index
    %13 = vector.load %arg4[%c0_7, %c0_8] : memref<128x128xbf16, #tpu.memory_space<vmem>>, vector<128x128xbf16>
    %cst_9 = arith.constant dense<0.000000e+00> : vector<16x128xf32>
    %14 = tpu.matmul %12, %13, %cst_9 {dimension_numbers = #tpu.dot_dimension_numbers<[1], [0], [0], [1], [0, 0, 1, 1], [], []>} : vector<16x128xbf16>, vector<128x128xbf16>, vector<16x128xf32> -> vector<16x128xf32>
    %c0_10 = arith.constant 0 : index
    %c0_11 = arith.constant 0 : index
    %15 = vector.load %arg5[%c0_10, %c0_11] : memref<1x128xf32, #tpu.memory_space<vmem>>, vector<1x128xf32>
    %16 = vector.broadcast %15 : vector<1x128xf32> to vector<16x128xf32>
    %17 = arith.addf %14, %16 : vector<16x128xf32>
    %cst_12 = arith.constant 0.000000e+00 : f32
    %18 = vector.broadcast %cst_12 : f32 to vector<16x128xf32>
    %19 = arith.cmpf ogt, %17, %18 : vector<16x128xf32>
    %cst_13 = arith.constant 2.000000e-01 : f32
    %20 = vector.broadcast %cst_13 : f32 to vector<16x128xf32>
    %21 = arith.mulf %20, %17 : vector<16x128xf32>
    %22 = arith.select %19, %17, %21 : vector<16x128xi1>, vector<16x128xf32>
    %23 = arith.truncf %22 : vector<16x128xf32> to vector<16x128xbf16>
    %c0_14 = arith.constant 0 : index
    %c0_15 = arith.constant 0 : index
    %24 = vector.load %arg6[%c0_14, %c0_15] : memref<128x128xbf16, #tpu.memory_space<vmem>>, vector<128x128xbf16>
    %cst_16 = arith.constant dense<0.000000e+00> : vector<16x128xf32>
    %25 = tpu.matmul %23, %24, %cst_16 {dimension_numbers = #tpu.dot_dimension_numbers<[1], [0], [0], [1], [0, 0, 1, 1], [], []>} : vector<16x128xbf16>, vector<128x128xbf16>, vector<16x128xf32> -> vector<16x128xf32>
    %c0_17 = arith.constant 0 : index
    %c0_18 = arith.constant 0 : index
    %26 = vector.load %arg7[%c0_17, %c0_18] : memref<1x128xf32, #tpu.memory_space<vmem>>, vector<1x128xf32>
    %27 = vector.broadcast %26 : vector<1x128xf32> to vector<16x128xf32>
    %28 = arith.addf %25, %27 : vector<16x128xf32>
    %cst_19 = arith.constant 0.000000e+00 : f32
    %29 = vector.broadcast %cst_19 : f32 to vector<16x128xf32>
    %30 = arith.cmpf ogt, %28, %29 : vector<16x128xf32>
    %cst_20 = arith.constant 2.000000e-01 : f32
    %31 = vector.broadcast %cst_20 : f32 to vector<16x128xf32>
    %32 = arith.mulf %31, %28 : vector<16x128xf32>
    %33 = arith.select %30, %28, %32 : vector<16x128xi1>, vector<16x128xf32>
    %34 = arith.truncf %33 : vector<16x128xf32> to vector<16x128xbf16>
    %c0_21 = arith.constant 0 : index
    %c0_22 = arith.constant 0 : index
    %35 = vector.load %arg8[%c0_21, %c0_22] : memref<128x128xbf16, #tpu.memory_space<vmem>>, vector<128x128xbf16>
    %cst_23 = arith.constant dense<0.000000e+00> : vector<16x128xf32>
    %36 = tpu.matmul %34, %35, %cst_23 {dimension_numbers = #tpu.dot_dimension_numbers<[1], [0], [0], [1], [0, 0, 1, 1], [], []>} : vector<16x128xbf16>, vector<128x128xbf16>, vector<16x128xf32> -> vector<16x128xf32>
    %c0_24 = arith.constant 0 : index
    %c0_25 = arith.constant 0 : index
    %37 = vector.load %arg9[%c0_24, %c0_25] : memref<1x128xf32, #tpu.memory_space<vmem>>, vector<1x128xf32>
    %38 = vector.broadcast %37 : vector<1x128xf32> to vector<16x128xf32>
    %39 = arith.addf %36, %38 : vector<16x128xf32>
    %40 = vector.extract_strided_slice %39 {offsets = [0, 0], sizes = [16, 1], strides = [1, 1]} : vector<16x128xf32> to vector<16x1xf32>
    %c0_26 = arith.constant 0 : index
    %c0_27 = arith.constant 0 : index
    %41 = vector.load %arg10[%c0_26, %c0_27] : memref<16x1xf32, #tpu.memory_space<vmem>>, vector<16x1xf32>
    tpu.vector_store %arg10[%c0_26, %c0_27], %40 {strides = array<i32>} : memref<16x1xf32, #tpu.memory_space<vmem>>, vector<16x1xf32>,
    return
  }
  func.func @transform_0(%arg0: i32) -> (i32, i32) {
    %c0_i32 = arith.constant 0 : i32
    %c0_i32_0 = arith.constant 0 : i32
    return %arg0, %c0_i32 : i32, i32
  }
  func.func @transform_1(%arg0: i32) -> (i32, i32) {
    %c0_i32 = arith.constant 0 : i32
    %c0_i32_0 = arith.constant 0 : i32
    %c0_i32_1 = arith.constant 0 : i32
    return %c0_i32, %c0_i32_0 : i32, i32
  }
  func.func @transform_2(%arg0: i32) -> (i32, i32) {
    %c0_i32 = arith.constant 0 : i32
    %c0_i32_0 = arith.constant 0 : i32
    %c0_i32_1 = arith.constant 0 : i32
    return %c0_i32, %c0_i32_0 : i32, i32
  }
  func.func @transform_3(%arg0: i32) -> (i32, i32) {
    %c0_i32 = arith.constant 0 : i32
    %c0_i32_0 = arith.constant 0 : i32
    %c0_i32_1 = arith.constant 0 : i32
    return %c0_i32, %c0_i32_0 : i32, i32
  }
  func.func @transform_4(%arg0: i32) -> (i32, i32) {
    %c0_i32 = arith.constant 0 : i32
    %c0_i32_0 = arith.constant 0 : i32
    %c0_i32_1 = arith.constant 0 : i32
    return %c0_i32, %c0_i32_0 : i32, i32
  }
  func.func @transform_5(%arg0: i32) -> (i32, i32) {
    %c0_i32 = arith.constant 0 : i32
    %c0_i32_0 = arith.constant 0 : i32
    %c0_i32_1 = arith.constant 0 : i32
    return %c0_i32, %c0_i32_0 : i32, i32
  }
  func.func @transform_6(%arg0: i32) -> (i32, i32) {
    %c0_i32 = arith.constant 0 : i32
    %c0_i32_0 = arith.constant 0 : i32
    %c0_i32_1 = arith.constant 0 : i32
    return %c0_i32, %c0_i32_0 : i32, i32
  }
  func.func @transform_7(%arg0: i32) -> (i32, i32) {
    %c0_i32 = arith.constant 0 : i32
    %c0_i32_0 = arith.constant 0 : i32
    %c0_i32_1 = arith.constant 0 : i32
    return %c0_i32, %c0_i32_0 : i32, i32
  }
  func.func @transform_8(%arg0: i32) -> (i32, i32) {
    %c0_i32 = arith.constant 0 : i32
    %c0_i32_0 = arith.constant 0 : i32
    %c0_i32_1 = arith.constant 0 : i32
    return %c0_i32, %c0_i32_0 : i32, i32
  }
  func.func @transform_9(%arg0: i32) -> (i32, i32) {
    %c0_i32 = arith.constant 0 : i32
    %c0_i32_0 = arith.constant 0 : i32
    return %arg0, %c0_i32 : i32, i32
  }
}

</mosaic_0001>

<llo_original>
// kernel: tpu_custom_call.1
$region0: #{tpu_custom_call.1}
  #allocation0 [shape = 'u32[]', space=smem, size = 0x4, offset = 0x4, fixed_abs, tag = 'smem constant byte address 0x4 - core index']
  #allocation1 [shape = 'u32[144,128]{1,0:T(1,128)}', space=vmem, size = 0x12000, scoped, tag = 'internal scratch']
  %s0 = inlined_call_operand.hbm [shape: f32[16,784], index: 0, kind: input, shape index: {}]
  %s1 = inlined_call_operand.hbm [shape: bf16[784,128], index: 1, kind: input, shape index: {}]
  %s2 = inlined_call_operand.vmem [shape: f32[1,128], index: 2, kind: input, shape index: {}]
  %s3 = inlined_call_operand.hbm [shape: bf16[128,128], index: 3, kind: input, shape index: {}]
  %s4 = inlined_call_operand.vmem [shape: f32[1,128], index: 4, kind: input, shape index: {}]
  %s5 = inlined_call_operand.hbm [shape: bf16[128,128], index: 5, kind: input, shape index: {}]
  %s6 = inlined_call_operand.vmem [shape: f32[1,128], index: 6, kind: input, shape index: {}]
  %s7 = inlined_call_operand.hbm [shape: bf16[128,128], index: 7, kind: input, shape index: {}]
  %s8 = inlined_call_operand.vmem [shape: f32[1,128], index: 8, kind: input, shape index: {}]
  %s9 = inlined_call_operand.vmem [shape: f32[16,1], index: 9, kind: output, shape index: {}]
  %s10 = sld [smem:[#allocation0]]
  $region66: #{tpu_custom_call.1} parent=0
    _
  %s12 = ssub.s32 1, %s10
  %s13 = scalar_select 0, %s12, %s10
  $region1: #{tpu_custom_call.1} parent=0
    #allocation2 [shape = 'u8[57344]{0}', space=vmem, size = 0xe000, scoped, tag = 'input window, operand 0, single buffered']
    #allocation3 [shape = 's32[1]{0}', space=sflag, size = 0x4, scoped, tag = 'scoped memory for tpu_custom_call.1']
    #allocation4 [shape = 'u8[200704]{0}', space=vmem, size = 0x31000, scoped, tag = 'input window, operand 1, single buffered']
    #allocation5 [shape = 's32[1]{0}', space=sflag, size = 0x4, scoped, tag = 'scoped memory for tpu_custom_call.1']
    #allocation6 [shape = 'u8[32768]{0}', space=vmem, size = 0x8000, scoped, tag = 'input window, operand 3, single buffered']
    #allocation7 [shape = 'u8[32768]{0}', space=vmem, size = 0x8000, scoped, tag = 'input window, operand 5, single buffered']
    #allocation8 [shape = 's32[1]{0}', space=sflag, size = 0x4, scoped, tag = 'scoped memory for tpu_custom_call.1']
    #allocation9 [shape = 'u8[32768]{0}', space=vmem, size = 0x8000, scoped, tag = 'input window, operand 7, single buffered']
    %14 = vsyncpa [#allocation3], 0
    %15 = vsyncpa [#allocation5], 0
    %16 = vsyncpa [#allocation8], 0
    // Predicated region
    $region2: #{tpu_custom_call.1} parent=1 // pred_check
      _
    $region3: #{tpu_custom_call.1} parent=1 // pred_check_branch
      %18 = sbr.rel (0) target = $region5
    $region4: #{tpu_custom_call.1} parent=1 // pred_region
      %s20 = ssub.s32 1792, 1792
      %21 = vsyncadd [#allocation3], %s20
      %s22 = sshll.u32 [#allocation2], 4
      %s23 = int_to_ptr.vmem [resolvable:$true] %s22
      %28 = dma.hbm_to_vmem [thread:$0]  %s0, 1792, %s23, [#allocation3], 896, 896, 56
    $region5: #{tpu_custom_call.1} parent=1 // pred_fallthru
      _
    // Predicated region
    $region6: #{tpu_custom_call.1} parent=1 // pred_check
      _
    $region7: #{tpu_custom_call.1} parent=1 // pred_check_branch
      %30 = sbr.rel (0) target = $region9
    $region8: #{tpu_custom_call.1} parent=1 // pred_region
      %s32 = ssub.s32 6272, 6272
      %33 = vsyncadd [#allocation5], %s32
      %s34 = sshll.u32 [#allocation4], 4
      %s35 = int_to_ptr.vmem [resolvable:$true] %s34
      %40 = dma.hbm_to_vmem [thread:$0]  %s1, 6272, %s35, [#allocation5], 64, 64, 4
    $region9: #{tpu_custom_call.1} parent=1 // pred_fallthru
      _
    // Predicated region
    $region10: #{tpu_custom_call.1} parent=1 // pred_check
      _
    $region11: #{tpu_custom_call.1} parent=1 // pred_check_branch
      %42 = sbr.rel (0) target = $region13
    $region12: #{tpu_custom_call.1} parent=1 // pred_region
      _
    $region13: #{tpu_custom_call.1} parent=1 // pred_fallthru
      _
    // Predicated region
    $region14: #{tpu_custom_call.1} parent=1 // pred_check
      _
    $region15: #{tpu_custom_call.1} parent=1 // pred_check_branch
      %44 = sbr.rel (0) target = $region17
    $region16: #{tpu_custom_call.1} parent=1 // pred_region
      %s46 = ssub.s32 1024, 1024
      %47 = vsyncadd [#allocation5], %s46
      %s48 = sshll.u32 [#allocation6], 4
      %s49 = int_to_ptr.vmem [resolvable:$true] %s48
      %54 = dma.hbm_to_vmem [thread:$0]  %s3, 1024, %s49, [#allocation5], 64, 64, 4
    $region17: #{tpu_custom_call.1} parent=1 // pred_fallthru
      _
    // Predicated region
    $region18: #{tpu_custom_call.1} parent=1 // pred_check
      _
    $region19: #{tpu_custom_call.1} parent=1 // pred_check_branch
      %56 = sbr.rel (0) target = $region21
    $region20: #{tpu_custom_call.1} parent=1 // pred_region
      _
    $region21: #{tpu_custom_call.1} parent=1 // pred_fallthru
      _
    // Predicated region
    $region22: #{tpu_custom_call.1} parent=1 // pred_check
      _
    $region23: #{tpu_custom_call.1} parent=1 // pred_check_branch
      %58 = sbr.rel (0) target = $region25
    $region24: #{tpu_custom_call.1} parent=1 // pred_region
      %s60 = ssub.s32 1024, 1024
      %61 = vsyncadd [#allocation8], %s60
      %s62 = sshll.u32 [#allocation7], 4
      %s63 = int_to_ptr.vmem [resolvable:$true] %s62
      %68 = dma.hbm_to_vmem [thread:$0]  %s5, 1024, %s63, [#allocation8], 64, 64, 4
    $region25: #{tpu_custom_call.1} parent=1 // pred_fallthru
      _
    // Predicated region
    $region26: #{tpu_custom_call.1} parent=1 // pred_check
      _
    $region27: #{tpu_custom_call.1} parent=1 // pred_check_branch
      %70 = sbr.rel (0) target = $region29
    $region28: #{tpu_custom_call.1} parent=1 // pred_region
      _
    $region29: #{tpu_custom_call.1} parent=1 // pred_fallthru
      _
    // Predicated region
    $region30: #{tpu_custom_call.1} parent=1 // pred_check
      _
    $region31: #{tpu_custom_call.1} parent=1 // pred_check_branch
      %72 = sbr.rel (0) target = $region33
    $region32: #{tpu_custom_call.1} parent=1 // pred_region
      %s74 = ssub.s32 1024, 1024
      %75 = vsyncadd [#allocation8], %s74
      %s76 = sshll.u32 [#allocation9], 4
      %s77 = int_to_ptr.vmem [resolvable:$true] %s76
      %82 = dma.hbm_to_vmem [thread:$0]  %s7, 1024, %s77, [#allocation8], 64, 64, 4
    $region33: #{tpu_custom_call.1} parent=1 // pred_fallthru
      _
    // Predicated region
    $region34: #{tpu_custom_call.1} parent=1 // pred_check
      _
    $region35: #{tpu_custom_call.1} parent=1 // pred_check_branch
      %84 = sbr.rel (0) target = $region37
    $region36: #{tpu_custom_call.1} parent=1 // pred_region
      _
    $region37: #{tpu_custom_call.1} parent=1 // pred_fallthru
      _
    // Predicated region
    $region38: #{tpu_custom_call.1} parent=1 // pred_check
      _
    $region39: #{tpu_custom_call.1} parent=1 // pred_check_branch
      %86 = sbr.rel (0) target = $region41
    $region40: #{tpu_custom_call.1} parent=1 // pred_region
      %87 = dma.done [#allocation3], 1792
    $region41: #{tpu_custom_call.1} parent=1 // pred_fallthru
      _
    // Predicated region
    $region42: #{tpu_custom_call.1} parent=1 // pred_check
      _
    $region43: #{tpu_custom_call.1} parent=1 // pred_check_branch
      %89 = sbr.rel (0) target = $region45
    $region44: #{tpu_custom_call.1} parent=1 // pred_region
      %90 = dma.done [#allocation5], 6272
    $region45: #{tpu_custom_call.1} parent=1 // pred_fallthru
      _
    // Predicated region
    $region46: #{tpu_custom_call.1} parent=1 // pred_check
      _
    $region47: #{tpu_custom_call.1} parent=1 // pred_check_branch
      %92 = sbr.rel (0) target = $region49
    $region48: #{tpu_custom_call.1} parent=1 // pred_region
      %93 = dma.done [#allocation5], 1024
    $region49: #{tpu_custom_call.1} parent=1 // pred_fallthru
      _
    // Predicated region
    $region50: #{tpu_custom_call.1} parent=1 // pred_check
      _
    $region51: #{tpu_custom_call.1} parent=1 // pred_check_branch
      %95 = sbr.rel (0) target = $region53
    $region52: #{tpu_custom_call.1} parent=1 // pred_region
      %96 = dma.done [#allocation8], 1024
    $region53: #{tpu_custom_call.1} parent=1 // pred_fallthru
      _
    // Predicated region
    $region54: #{tpu_custom_call.1} parent=1 // pred_check
      _
    $region55: #{tpu_custom_call.1} parent=1 // pred_check_branch
      %98 = sbr.rel (0) target = $region57
    $region56: #{tpu_custom_call.1} parent=1 // pred_region
      %99 = dma.done [#allocation8], 1024
    $region57: #{tpu_custom_call.1} parent=1 // pred_fallthru
      _
    %v101 = vld [vmem:[#allocation2] sm:$0xff]
    %v102 = vld [vmem:[#allocation2 + $0x8] sm:$0xff]
    %v103 = vld [vmem:[#allocation2 + $0x10] sm:$0xff]
    %v104 = vld [vmem:[#allocation2 + $0x18] sm:$0xff]
    %v105 = vld [vmem:[#allocation2 + $0x20] sm:$0xff]
    %v106 = vld [vmem:[#allocation2 + $0x28] sm:$0xff]
    %v107 = vld [vmem:[#allocation2 + $0x30] sm:$0xff]
    %v108 = vld [vmem:[#allocation2 + $0x38] sm:$0xff]
    %v109 = vld [vmem:[#allocation2 + $0x40] sm:$0xff]
    %v110 = vld [vmem:[#allocation2 + $0x48] sm:$0xff]
    %v111 = vld [vmem:[#allocation2 + $0x50] sm:$0xff]
    %v112 = vld [vmem:[#allocation2 + $0x58] sm:$0xff]
    %v113 = vld [vmem:[#allocation2 + $0x60] sm:$0xff]
    %v114 = vld [vmem:[#allocation2 + $0x68] sm:$0xff]
    %v115 = vpack.c.bf16 %v108, %v101
    %v116 = vpack.c.bf16 %v109, %v102
    %v117 = vpack.c.bf16 %v110, %v103
    %v118 = vpack.c.bf16 %v111, %v104
    %v119 = vpack.c.bf16 %v112, %v105
    %v120 = vpack.c.bf16 %v113, %v106
    %v121 = vpack.c.bf16 %v114, %v107
    %v122 = vld [vmem:[#allocation4] sm:$0xf]
    %v123 = vld [vmem:[#allocation4 + $0x4] sm:$0xf]
    %v124 = vld [vmem:[#allocation4 + $0x8] sm:$0xf]
    %v125 = vld [vmem:[#allocation4 + $0xc] sm:$0xf]
    %v126 = vld [vmem:[#allocation4 + $0x10] sm:$0xf]
    %v127 = vld [vmem:[#allocation4 + $0x14] sm:$0xf]
    %v128 = vld [vmem:[#allocation4 + $0x18] sm:$0xf]
    %v129 = vld [vmem:[#allocation4 + $0x1c] sm:$0xf]
    %v130 = vld [vmem:[#allocation4 + $0x20] sm:$0xf]
    %v131 = vld [vmem:[#allocation4 + $0x24] sm:$0xf]
    %v132 = vld [vmem:[#allocation4 + $0x28] sm:$0xf]
    %v133 = vld [vmem:[#allocation4 + $0x2c] sm:$0xf]
    %v134 = vld [vmem:[#allocation4 + $0x30] sm:$0xf]
    %v135 = vld [vmem:[#allocation4 + $0x34] sm:$0xf]
    %v136 = vld [vmem:[#allocation4 + $0x38] sm:$0xf]
    %v137 = vld [vmem:[#allocation4 + $0x3c] sm:$0xf]
    %v138 = vld [vmem:[#allocation4 + $0x40] sm:$0xf]
    %v139 = vld [vmem:[#allocation4 + $0x44] sm:$0xf]
    %v140 = vld [vmem:[#allocation4 + $0x48] sm:$0xf]
    %v141 = vld [vmem:[#allocation4 + $0x4c] sm:$0xf]
    %v142 = vld [vmem:[#allocation4 + $0x50] sm:$0xf]
    %v143 = vld [vmem:[#allocation4 + $0x54] sm:$0xf]
    %v144 = vld [vmem:[#allocation4 + $0x58] sm:$0xf]
    %v145 = vld [vmem:[#allocation4 + $0x5c] sm:$0xf]
    %v146 = vld [vmem:[#allocation4 + $0x60] sm:$0xf]
    %v147 = vld [vmem:[#allocation4 + $0x64] sm:$0xf]
    %v148 = vld [vmem:[#allocation4 + $0x68] sm:$0xf]
    %v149 = vld [vmem:[#allocation4 + $0x6c] sm:$0xf]
    %v150 = vld [vmem:[#allocation4 + $0x70] sm:$0xf]
    %v151 = vld [vmem:[#allocation4 + $0x74] sm:$0xf]
    %v152 = vld [vmem:[#allocation4 + $0x78] sm:$0xf]
    %v153 = vld [vmem:[#allocation4 + $0x7c] sm:$0xf]
    %v154 = vld [vmem:[#allocation4 + $0x80] sm:$0xf]
    %v155 = vld [vmem:[#allocation4 + $0x84] sm:$0xf]
    %v156 = vld [vmem:[#allocation4 + $0x88] sm:$0xf]
    %v157 = vld [vmem:[#allocation4 + $0x8c] sm:$0xf]
    %v158 = vld [vmem:[#allocation4 + $0x90] sm:$0xf]
    %v159 = vld [vmem:[#allocation4 + $0x94] sm:$0xf]
    %v160 = vld [vmem:[#allocation4 + $0x98] sm:$0xf]
    %v161 = vld [vmem:[#allocation4 + $0x9c] sm:$0xf]
    %v162 = vld [vmem:[#allocation4 + $0xa0] sm:$0xf]
    %v163 = vld [vmem:[#allocation4 + $0xa4] sm:$0xf]
    %v164 = vld [vmem:[#allocation4 + $0xa8] sm:$0xf]
    %v165 = vld [vmem:[#allocation4 + $0xac] sm:$0xf]
    %v166 = vld [vmem:[#allocation4 + $0xb0] sm:$0xf]
    %v167 = vld [vmem:[#allocation4 + $0xb4] sm:$0xf]
    %v168 = vld [vmem:[#allocation4 + $0xb8] sm:$0xf]
    %v169 = vld [vmem:[#allocation4 + $0xbc] sm:$0xf]
    %v170 = vld [vmem:[#allocation4 + $0xc0] sm:$0xf]
    %v171 = vld [vmem:[#allocation4 + $0xc4] sm:$0xf]
    %v172 = vld [vmem:[#allocation4 + $0xc8] sm:$0xf]
    %v173 = vld [vmem:[#allocation4 + $0xcc] sm:$0xf]
    %v174 = vld [vmem:[#allocation4 + $0xd0] sm:$0xf]
    %v175 = vld [vmem:[#allocation4 + $0xd4] sm:$0xf]
    %v176 = vld [vmem:[#allocation4 + $0xd8] sm:$0xf]
    %v177 = vld [vmem:[#allocation4 + $0xdc] sm:$0xf]
    %v178 = vld [vmem:[#allocation4 + $0xe0] sm:$0xf]
    %v179 = vld [vmem:[#allocation4 + $0xe4] sm:$0xf]
    %v180 = vld [vmem:[#allocation4 + $0xe8] sm:$0xf]
    %v181 = vld [vmem:[#allocation4 + $0xec] sm:$0xf]
    %v182 = vld [vmem:[#allocation4 + $0xf0] sm:$0xf]
    %v183 = vld [vmem:[#allocation4 + $0xf4] sm:$0xf]
    %v184 = vld [vmem:[#allocation4 + $0xf8] sm:$0xf]
    %v185 = vld [vmem:[#allocation4 + $0xfc] sm:$0xf]
    %v186 = vld [vmem:[#allocation4 + $0x100] sm:$0xf]
    %v187 = vld [vmem:[#allocation4 + $0x104] sm:$0xf]
    %v188 = vld [vmem:[#allocation4 + $0x108] sm:$0xf]
    %v189 = vld [vmem:[#allocation4 + $0x10c] sm:$0xf]
    %v190 = vld [vmem:[#allocation4 + $0x110] sm:$0xf]
    %v191 = vld [vmem:[#allocation4 + $0x114] sm:$0xf]
    %v192 = vld [vmem:[#allocation4 + $0x118] sm:$0xf]
    %v193 = vld [vmem:[#allocation4 + $0x11c] sm:$0xf]
    %v194 = vld [vmem:[#allocation4 + $0x120] sm:$0xf]
    %v195 = vld [vmem:[#allocation4 + $0x124] sm:$0xf]
    %v196 = vld [vmem:[#allocation4 + $0x128] sm:$0xf]
    %v197 = vld [vmem:[#allocation4 + $0x12c] sm:$0xf]
    %v198 = vld [vmem:[#allocation4 + $0x130] sm:$0xf]
    %v199 = vld [vmem:[#allocation4 + $0x134] sm:$0xf]
    %v200 = vld [vmem:[#allocation4 + $0x138] sm:$0xf]
    %v201 = vld [vmem:[#allocation4 + $0x13c] sm:$0xf]
    %v202 = vld [vmem:[#allocation4 + $0x140] sm:$0xf]
    %v203 = vld [vmem:[#allocation4 + $0x144] sm:$0xf]
    %v204 = vld [vmem:[#allocation4 + $0x148] sm:$0xf]
    %v205 = vld [vmem:[#allocation4 + $0x14c] sm:$0xf]
    %v206 = vld [vmem:[#allocation4 + $0x150] sm:$0xf]
    %v207 = vld [vmem:[#allocation4 + $0x154] sm:$0xf]
    %v208 = vld [vmem:[#allocation4 + $0x158] sm:$0xf]
    %v209 = vld [vmem:[#allocation4 + $0x15c] sm:$0xf]
    %v210 = vld [vmem:[#allocation4 + $0x160] sm:$0xf]
    %v211 = vld [vmem:[#allocation4 + $0x164] sm:$0xf]
    %v212 = vld [vmem:[#allocation4 + $0x168] sm:$0xf]
    %v213 = vld [vmem:[#allocation4 + $0x16c] sm:$0xf]
    %v214 = vld [vmem:[#allocation4 + $0x170] sm:$0xf]
    %v215 = vld [vmem:[#allocation4 + $0x174] sm:$0xf]
    %v216 = vld [vmem:[#allocation4 + $0x178] sm:$0xf]
    %v217 = vld [vmem:[#allocation4 + $0x17c] sm:$0xf]
    %v218 = vld [vmem:[#allocation4 + $0x180] sm:$0xf]
    %v219 = vld [vmem:[#allocation4 + $0x184] sm:$0xf]
    %v220 = vld [vmem:[%s2] sm:$0x1]
    %v222 = vlaneseq
    %v223 = vshrl.u32 %v222, 7
    %v224 = vsub.s32 0, %v223
    %v225 = vrot.slane %v220, %v224
    %v325 = vunpack.c.l.b16 %v122
    %v326 = vunpack.c.l.b16 %v123
    %v327 = vunpack.c.l.b16 %v124
    %v328 = vunpack.c.l.b16 %v125
    %v329 = vunpack.c.l.b16 %v126
    %v330 = vunpack.c.l.b16 %v127
    %v331 = vunpack.c.l.b16 %v128
    %v332 = vunpack.c.l.b16 %v129
    %v333 = vunpack.c.l.b16 %v130
    %v334 = vunpack.c.l.b16 %v131
    %v335 = vunpack.c.l.b16 %v132
    %v336 = vunpack.c.l.b16 %v133
    %v337 = vunpack.c.l.b16 %v134
    %v338 = vunpack.c.l.b16 %v135
    %v339 = vunpack.c.l.b16 %v136
    %v340 = vunpack.c.l.b16 %v137
    %v341 = vunpack.c.l.b16 %v138
    %v342 = vunpack.c.l.b16 %v139
    %v343 = vunpack.c.l.b16 %v140
    %v344 = vunpack.c.l.b16 %v141
    %v345 = vunpack.c.l.b16 %v142
    %v346 = vunpack.c.l.b16 %v143
    %v347 = vunpack.c.l.b16 %v144
    %v348 = vunpack.c.l.b16 %v145
    %v349 = vunpack.c.l.b16 %v146
    %v350 = vunpack.c.l.b16 %v147
    %v351 = vunpack.c.l.b16 %v148
    %v352 = vunpack.c.l.b16 %v149
    %v353 = vunpack.c.l.b16 %v150
    %v354 = vunpack.c.l.b16 %v151
    %v355 = vunpack.c.l.b16 %v152
    %v356 = vunpack.c.l.b16 %v153
    %v357 = vunpack.c.l.b16 %v154
    %v358 = vunpack.c.l.b16 %v155
    %v359 = vunpack.c.l.b16 %v156
    %v360 = vunpack.c.l.b16 %v157
    %v361 = vunpack.c.l.b16 %v158
    %v362 = vunpack.c.l.b16 %v159
    %v363 = vunpack.c.l.b16 %v160
    %v364 = vunpack.c.l.b16 %v161
    %v365 = vunpack.c.l.b16 %v162
    %v366 = vunpack.c.l.b16 %v163
    %v367 = vunpack.c.l.b16 %v164
    %v368 = vunpack.c.l.b16 %v165
    %v369 = vunpack.c.l.b16 %v166
    %v370 = vunpack.c.l.b16 %v167
    %v371 = vunpack.c.l.b16 %v168
    %v372 = vunpack.c.l.b16 %v169
    %v373 = vunpack.c.l.b16 %v170
    %v374 = vunpack.c.l.b16 %v171
    %v375 = vunpack.c.l.b16 %v172
    %v376 = vunpack.c.l.b16 %v173
    %v377 = vunpack.c.l.b16 %v174
    %v378 = vunpack.c.l.b16 %v175
    %v379 = vunpack.c.l.b16 %v176
    %v380 = vunpack.c.l.b16 %v177
    %v381 = vunpack.c.l.b16 %v178
    %v382 = vunpack.c.l.b16 %v179
    %v383 = vunpack.c.l.b16 %v180
    %v384 = vunpack.c.l.b16 %v181
    %v385 = vunpack.c.l.b16 %v182
    %v386 = vunpack.c.l.b16 %v183
    %v387 = vunpack.c.l.b16 %v184
    %v388 = vunpack.c.l.b16 %v185
    %v389 = vunpack.c.l.b16 %v186
    %v390 = vunpack.c.l.b16 %v187
    %v391 = vunpack.c.l.b16 %v188
    %v392 = vunpack.c.l.b16 %v189
    %v393 = vunpack.c.l.b16 %v190
    %v394 = vunpack.c.l.b16 %v191
    %v395 = vunpack.c.l.b16 %v192
    %v396 = vunpack.c.l.b16 %v193
    %v397 = vunpack.c.l.b16 %v194
    %v398 = vunpack.c.l.b16 %v195
    %v399 = vunpack.c.l.b16 %v196
    %v400 = vunpack.c.l.b16 %v197
    %v401 = vunpack.c.l.b16 %v198
    %v402 = vunpack.c.l.b16 %v199
    %v403 = vunpack.c.l.b16 %v200
    %v404 = vunpack.c.l.b16 %v201
    %v405 = vunpack.c.l.b16 %v202
    %v406 = vunpack.c.l.b16 %v203
    %v407 = vunpack.c.l.b16 %v204
    %v408 = vunpack.c.l.b16 %v205
    %v409 = vunpack.c.l.b16 %v206
    %v410 = vunpack.c.l.b16 %v207
    %v411 = vunpack.c.l.b16 %v208
    %v412 = vunpack.c.l.b16 %v209
    %v413 = vunpack.c.l.b16 %v210
    %v414 = vunpack.c.l.b16 %v211
    %v415 = vunpack.c.l.b16 %v212
    %v416 = vunpack.c.l.b16 %v213
    %v417 = vunpack.c.l.b16 %v214
    %v418 = vunpack.c.l.b16 %v215
    %v419 = vunpack.c.l.b16 %v216
    %v420 = vunpack.c.l.b16 %v217
    %v421 = vunpack.c.l.b16 %v218
    %v422 = vunpack.c.l.b16 %v219
    %v423 = vpack.c.b16 %v326, %v325
    %v424 = vpack.c.b16 %v328, %v327
    %v425 = vpack.c.b16 %v330, %v329
    %v426 = vpack.c.b16 %v332, %v331
    %v427 = vpack.c.b16 %v334, %v333
    %v428 = vpack.c.b16 %v336, %v335
    %v429 = vpack.c.b16 %v338, %v337
    %v430 = vpack.c.b16 %v340, %v339
    %v431 = vpack.c.b16 %v342, %v341
    %v432 = vpack.c.b16 %v344, %v343
    %v433 = vpack.c.b16 %v346, %v345
    %v434 = vpack.c.b16 %v348, %v347
    %v435 = vpack.c.b16 %v350, %v349
    %v436 = vpack.c.b16 %v352, %v351
    %v437 = vpack.c.b16 %v354, %v353
    %v438 = vpack.c.b16 %v356, %v355
    %v439 = vpack.c.b16 %v358, %v357
    %v440 = vpack.c.b16 %v360, %v359
    %v441 = vpack.c.b16 %v362, %v361
    %v442 = vpack.c.b16 %v364, %v363
    %v443 = vpack.c.b16 %v366, %v365
    %v444 = vpack.c.b16 %v368, %v367
    %v445 = vpack.c.b16 %v370, %v369
    %v446 = vpack.c.b16 %v372, %v371
    %v447 = vpack.c.b16 %v374, %v373
    %v448 = vpack.c.b16 %v376, %v375
    %v449 = vpack.c.b16 %v378, %v377
    %v450 = vpack.c.b16 %v380, %v379
    %v451 = vpack.c.b16 %v382, %v381
    %v452 = vpack.c.b16 %v384, %v383
    %v453 = vpack.c.b16 %v386, %v385
    %v454 = vpack.c.b16 %v388, %v387
    %v455 = vpack.c.b16 %v390, %v389
    %v456 = vpack.c.b16 %v392, %v391
    %v457 = vpack.c.b16 %v394, %v393
    %v458 = vpack.c.b16 %v396, %v395
    %v459 = vpack.c.b16 %v398, %v397
    %v460 = vpack.c.b16 %v400, %v399
    %v461 = vpack.c.b16 %v402, %v401
    %v462 = vpack.c.b16 %v404, %v403
    %v463 = vpack.c.b16 %v406, %v405
    %v464 = vpack.c.b16 %v408, %v407
    %v465 = vpack.c.b16 %v410, %v409
    %v466 = vpack.c.b16 %v412, %v411
    %v467 = vpack.c.b16 %v414, %v413
    %v468 = vpack.c.b16 %v416, %v415
    %v469 = vpack.c.b16 %v418, %v417
    %v470 = vpack.c.b16 %v420, %v419
    %v471 = vpack.c.b16 %v422, %v421
    %vm521 = vcmask 130048
    %v523 = vsel %vm521, %v121, 0
    %525 = vmatprep.subr.bf16.mxu0 0
    %526 = vmatpush1.bf16.msra.mxu0 %v423
    %527 = vmatprep.subr.bf16.mxu0 0
    %528 = vmatpush1.bf16.msra.mxu0 %v424
    %529 = vmatprep.subr.bf16.mxu0 0
    %530 = vmatpush1.bf16.msra.mxu0 %v425
    %531 = vmatprep.subr.bf16.mxu0 0
    %532 = vmatpush1.bf16.msra.mxu0 %v426
    %533 = vmatprep.subr.bf16.mxu0 0
    %534 = vmatpush1.bf16.msra.mxu0 %v427
    %535 = vmatprep.subr.bf16.mxu0 0
    %536 = vmatpush1.bf16.msra.mxu0 %v428
    %537 = vmatprep.subr.bf16.mxu0 0
    %538 = vmatpush1.bf16.msra.mxu0 %v429
    %539 = vmatprep.subr.bf16.mxu0 0
    %540 = vmatpush1.bf16.msra.mxu0 %v430
    %541 = vmatprep.subr.bf16.mxu0 0
    %542 = vmatpush1.bf16.msra.mxu0 %v431
    %543 = vmatprep.subr.bf16.mxu0 0
    %544 = vmatpush1.bf16.msra.mxu0 %v432
    %545 = vmatprep.subr.bf16.mxu0 0
    %546 = vmatpush1.bf16.msra.mxu0 %v433
    %547 = vmatprep.subr.bf16.mxu0 0
    %548 = vmatpush1.bf16.msra.mxu0 %v434
    %549 = vmatprep.subr.bf16.mxu0 0
    %550 = vmatpush1.bf16.msra.mxu0 %v435
    %551 = vmatprep.subr.bf16.mxu0 0
    %552 = vmatpush1.bf16.msra.mxu0 %v436
    %553 = vmatprep.subr.bf16.mxu0 0
    %554 = vmatpush1.bf16.msra.mxu0 %v437
    %555 = vmatprep.subr.bf16.mxu0 0
    %556 = vmatpush1.bf16.msra.mxu0 %v438
    %557 = vmatprep.mubr.bf16.mxu0 %v116
    %558 = vmatmul.mubr.bf16.gmra.mrb[0].mxu0 %v115
    %v559 = vpop.f32.mrb[0].mxu0
    %v560 = vadd.f32 %v225, %v559
    %v561 = vpop.f32.mrb[0].mxu0
    %v562 = vpop.f32.mrb[0].mxu0
    %v563 = vadd.f32 %v225, %v562
    %v564 = vpop.f32.mrb[0].mxu0
    %565 = vdwg.mxu0
    %566 = vmatprep.subr.bf16.mxu0 0
    %567 = vmatpush1.bf16.msra.mxu0 %v439
    %568 = vmatprep.subr.bf16.mxu0 0
    %569 = vmatpush1.bf16.msra.mxu0 %v440
    %570 = vmatprep.subr.bf16.mxu0 0
    %571 = vmatpush1.bf16.msra.mxu0 %v441
    %572 = vmatprep.subr.bf16.mxu0 0
    %573 = vmatpush1.bf16.msra.mxu0 %v442
    %574 = vmatprep.subr.bf16.mxu0 0
    %575 = vmatpush1.bf16.msra.mxu0 %v443
    %576 = vmatprep.subr.bf16.mxu0 0
    %577 = vmatpush1.bf16.msra.mxu0 %v444
    %578 = vmatprep.subr.bf16.mxu0 0
    %579 = vmatpush1.bf16.msra.mxu0 %v445
    %580 = vmatprep.subr.bf16.mxu0 0
    %581 = vmatpush1.bf16.msra.mxu0 %v446
    %582 = vmatprep.subr.bf16.mxu0 0
    %583 = vmatpush1.bf16.msra.mxu0 %v447
    %584 = vmatprep.subr.bf16.mxu0 0
    %585 = vmatpush1.bf16.msra.mxu0 %v448
    %586 = vmatprep.subr.bf16.mxu0 0
    %587 = vmatpush1.bf16.msra.mxu0 %v449
    %588 = vmatprep.subr.bf16.mxu0 0
    %589 = vmatpush1.bf16.msra.mxu0 %v450
    %590 = vmatprep.subr.bf16.mxu0 0
    %591 = vmatpush1.bf16.msra.mxu0 %v451
    %592 = vmatprep.subr.bf16.mxu0 0
    %593 = vmatpush1.bf16.msra.mxu0 %v452
    %594 = vmatprep.subr.bf16.mxu0 0
    %595 = vmatpush1.bf16.msra.mxu0 %v453
    %596 = vmatprep.subr.bf16.mxu0 0
    %597 = vmatpush1.bf16.msra.mxu0 %v454
    %598 = vmatprep.mubr.bf16.mxu0 %v118
    %599 = vmatmul.mubr.bf16.gmra.mrb[0].mxu0 %v117
    %v600 = vpop.f32.mrb[0].mxu0
    %v601 = vadd.f32 %v560, %v600
    %v602 = vpop.f32.mrb[0].mxu0
    %v603 = vpop.f32.mrb[0].mxu0
    %v604 = vadd.f32 %v563, %v603
    %v605 = vpop.f32.mrb[0].mxu0
    %606 = vdwg.mxu0
    %607 = vmatprep.subr.bf16.mxu0 0
    %608 = vmatpush1.bf16.msra.mxu0 %v455
    %609 = vmatprep.subr.bf16.mxu0 0
    %610 = vmatpush1.bf16.msra.mxu0 %v456
    %611 = vmatprep.subr.bf16.mxu0 0
    %612 = vmatpush1.bf16.msra.mxu0 %v457
    %613 = vmatprep.subr.bf16.mxu0 0
    %614 = vmatpush1.bf16.msra.mxu0 %v458
    %615 = vmatprep.subr.bf16.mxu0 0
    %616 = vmatpush1.bf16.msra.mxu0 %v459
    %617 = vmatprep.subr.bf16.mxu0 0
    %618 = vmatpush1.bf16.msra.mxu0 %v460
    %619 = vmatprep.subr.bf16.mxu0 0
    %620 = vmatpush1.bf16.msra.mxu0 %v461
    %621 = vmatprep.subr.bf16.mxu0 0
    %622 = vmatpush1.bf16.msra.mxu0 %v462
    %623 = vmatprep.subr.bf16.mxu0 0
    %624 = vmatpush1.bf16.msra.mxu0 %v463
    %625 = vmatprep.subr.bf16.mxu0 0
    %626 = vmatpush1.bf16.msra.mxu0 %v464
    %627 = vmatprep.subr.bf16.mxu0 0
    %628 = vmatpush1.bf16.msra.mxu0 %v465
    %629 = vmatprep.subr.bf16.mxu0 0
    %630 = vmatpush1.bf16.msra.mxu0 %v466
    %631 = vmatprep.subr.bf16.mxu0 0
    %632 = vmatpush1.bf16.msra.mxu0 %v467
    %633 = vmatprep.subr.bf16.mxu0 0
    %634 = vmatpush1.bf16.msra.mxu0 %v468
    %635 = vmatprep.subr.bf16.mxu0 0
    %636 = vmatpush1.bf16.msra.mxu0 %v469
    %637 = vmatprep.subr.bf16.mxu0 0
    %638 = vmatpush1.bf16.msra.mxu0 %v470
    %639 = vmatprep.mubr.bf16.mxu0 %v120
    %640 = vmatmul.mubr.bf16.gmra.mrb[0].mxu0 %v119
    %v641 = vpop.f32.mrb[0].mxu0
    %v642 = vadd.f32 %v601, %v641
    %v643 = vpop.f32.mrb[0].mxu0
    %v644 = vpop.f32.mrb[0].mxu0
    %v645 = vadd.f32 %v604, %v644
    %v646 = vpop.f32.mrb[0].mxu0
    %647 = vdwg.mxu0
    %648 = vmatprep.subr.bf16.mxu0 0
    %649 = vmatpush1.bf16.msra.mxu0 %v471
    %650 = vmatprep.subr.bf16.mxu0 0
    %651 = vmatpush1.bf16.msra.mxu0 0
    %652 = vmatprep.subr.bf16.mxu0 0
    %653 = vmatpush1.bf16.msra.mxu0 0
    %654 = vmatprep.subr.bf16.mxu0 0
    %655 = vmatpush1.bf16.msra.mxu0 0
    %656 = vmatprep.subr.bf16.mxu0 0
    %657 = vmatpush1.bf16.msra.mxu0 0
    %658 = vmatprep.subr.bf16.mxu0 0
    %659 = vmatpush1.bf16.msra.mxu0 0
    %660 = vmatprep.subr.bf16.mxu0 0
    %661 = vmatpush1.bf16.msra.mxu0 0
    %662 = vmatprep.subr.bf16.mxu0 0
    %663 = vmatpush1.bf16.msra.mxu0 0
    %664 = vmatprep.subr.bf16.mxu0 0
    %665 = vmatpush1.bf16.msra.mxu0 0
    %666 = vmatprep.subr.bf16.mxu0 0
    %667 = vmatpush1.bf16.msra.mxu0 0
    %668 = vmatprep.subr.bf16.mxu0 0
    %669 = vmatpush1.bf16.msra.mxu0 0
    %670 = vmatprep.subr.bf16.mxu0 0
    %671 = vmatpush1.bf16.msra.mxu0 0
    %672 = vmatprep.subr.bf16.mxu0 0
    %673 = vmatpush1.bf16.msra.mxu0 0
    %674 = vmatprep.subr.bf16.mxu0 0
    %675 = vmatpush1.bf16.msra.mxu0 0
    %676 = vmatprep.subr.bf16.mxu0 0
    %677 = vmatpush1.bf16.msra.mxu0 0
    %678 = vmatprep.subr.bf16.mxu0 0
    %679 = vmatpush1.bf16.msra.mxu0 0
    %680 = vmatprep.mubr.bf16.mxu0 0
    %681 = vmatmul.mubr.bf16.gmra.mrb[0].mxu0 %v523
    %v682 = vpop.f32.mrb[0].mxu0
    %v683 = vadd.f32 %v642, %v682
    %v684 = vpop.f32.mrb[0].mxu0
    %v685 = vpop.f32.mrb[0].mxu0
    %v686 = vadd.f32 %v645, %v685
    %v687 = vpop.f32.mrb[0].mxu0
    %688 = vdwg.mxu0
    %vm689 = vcmp.gt.f32.partialorder %v683, 0.0
    %vm690 = vcmp.gt.f32.partialorder %v686, 0.0
    %v691 = vmul.f32 %v683, 0.2
    %v692 = vmul.f32 %v686, 0.2
    %v693 = vsel %vm689, %v683, %v691
    %v694 = vsel %vm690, %v686, %v692
    %v695 = vpack.c.bf16 %v694, %v693
    %v696 = vld [vmem:[#allocation6] sm:$0xf]
    %v697 = vld [vmem:[#allocation6 + $0x4] sm:$0xf]
    %v698 = vld [vmem:[#allocation6 + $0x8] sm:$0xf]
    %v699 = vld [vmem:[#allocation6 + $0xc] sm:$0xf]
    %v700 = vld [vmem:[#allocation6 + $0x10] sm:$0xf]
    %v701 = vld [vmem:[#allocation6 + $0x14] sm:$0xf]
    %v702 = vld [vmem:[#allocation6 + $0x18] sm:$0xf]
    %v703 = vld [vmem:[#allocation6 + $0x1c] sm:$0xf]
    %v704 = vld [vmem:[#allocation6 + $0x20] sm:$0xf]
    %v705 = vld [vmem:[#allocation6 + $0x24] sm:$0xf]
    %v706 = vld [vmem:[#allocation6 + $0x28] sm:$0xf]
    %v707 = vld [vmem:[#allocation6 + $0x2c] sm:$0xf]
    %v708 = vld [vmem:[#allocation6 + $0x30] sm:$0xf]
    %v709 = vld [vmem:[#allocation6 + $0x34] sm:$0xf]
    %v710 = vld [vmem:[#allocation6 + $0x38] sm:$0xf]
    %v711 = vld [vmem:[#allocation6 + $0x3c] sm:$0xf]
    %v712 = vld [vmem:[%s4] sm:$0x1]
    %v714 = vlaneseq
    %v715 = vshrl.u32 %v714, 7
    %v716 = vsub.s32 0, %v715
    %v717 = vrot.slane %v712, %v716
    %v735 = vunpack.c.l.b16 %v696
    %v736 = vunpack.c.l.b16 %v697
    %v737 = vunpack.c.l.b16 %v698
    %v738 = vunpack.c.l.b16 %v699
    %v739 = vunpack.c.l.b16 %v700
    %v740 = vunpack.c.l.b16 %v701
    %v741 = vunpack.c.l.b16 %v702
    %v742 = vunpack.c.l.b16 %v703
    %v743 = vunpack.c.l.b16 %v704
    %v744 = vunpack.c.l.b16 %v705
    %v745 = vunpack.c.l.b16 %v706
    %v746 = vunpack.c.l.b16 %v707
    %v747 = vunpack.c.l.b16 %v708
    %v748 = vunpack.c.l.b16 %v709
    %v749 = vunpack.c.l.b16 %v710
    %v750 = vunpack.c.l.b16 %v711
    %v751 = vpack.c.b16 %v736, %v735
    %v752 = vpack.c.b16 %v738, %v737
    %v753 = vpack.c.b16 %v740, %v739
    %v754 = vpack.c.b16 %v742, %v741
    %v755 = vpack.c.b16 %v744, %v743
    %v756 = vpack.c.b16 %v746, %v745
    %v757 = vpack.c.b16 %v748, %v747
    %v758 = vpack.c.b16 %v750, %v749
    %767 = vmatprep.subr.bf16.mxu0 0
    %768 = vmatpush1.bf16.msra.mxu0 %v751
    %769 = vmatprep.subr.bf16.mxu0 0
    %770 = vmatpush1.bf16.msra.mxu0 %v752
    %771 = vmatprep.subr.bf16.mxu0 0
    %772 = vmatpush1.bf16.msra.mxu0 %v753
    %773 = vmatprep.subr.bf16.mxu0 0
    %774 = vmatpush1.bf16.msra.mxu0 %v754
    %775 = vmatprep.subr.bf16.mxu0 0
    %776 = vmatpush1.bf16.msra.mxu0 %v755
    %777 = vmatprep.subr.bf16.mxu0 0
    %778 = vmatpush1.bf16.msra.mxu0 %v756
    %779 = vmatprep.subr.bf16.mxu0 0
    %780 = vmatpush1.bf16.msra.mxu0 %v757
    %781 = vmatprep.subr.bf16.mxu0 0
    %782 = vmatpush1.bf16.msra.mxu0 %v758
    %783 = vmatprep.subr.bf16.mxu0 0
    %784 = vmatpush1.bf16.msra.mxu0 0
    %785 = vmatprep.subr.bf16.mxu0 0
    %786 = vmatpush1.bf16.msra.mxu0 0
    %787 = vmatprep.subr.bf16.mxu0 0
    %788 = vmatpush1.bf16.msra.mxu0 0
    %789 = vmatprep.subr.bf16.mxu0 0
    %790 = vmatpush1.bf16.msra.mxu0 0
    %791 = vmatprep.subr.bf16.mxu0 0
    %792 = vmatpush1.bf16.msra.mxu0 0
    %793 = vmatprep.subr.bf16.mxu0 0
    %794 = vmatpush1.bf16.msra.mxu0 0
    %795 = vmatprep.subr.bf16.mxu0 0
    %796 = vmatpush1.bf16.msra.mxu0 0
    %797 = vmatprep.subr.bf16.mxu0 0
    %798 = vmatpush1.bf16.msra.mxu0 0
    %799 = vmatprep.mubr.bf16.mxu0 0
    %800 = vmatmul.mubr.bf16.gmra.mrb[0].mxu0 %v695
    %v801 = vpop.f32.mrb[0].mxu0
    %v802 = vadd.f32 %v717, %v801
    %v803 = vpop.f32.mrb[0].mxu0
    %v804 = vpop.f32.mrb[0].mxu0
    %v805 = vadd.f32 %v717, %v804
    %v806 = vpop.f32.mrb[0].mxu0
    %807 = vdwg.mxu0
    %vm808 = vcmp.gt.f32.partialorder %v802, 0.0
    %vm809 = vcmp.gt.f32.partialorder %v805, 0.0
    %v810 = vmul.f32 %v802, 0.2
    %v811 = vmul.f32 %v805, 0.2
    %v812 = vsel %vm808, %v802, %v810
    %v813 = vsel %vm809, %v805, %v811
    %v814 = vpack.c.bf16 %v813, %v812
    %v815 = vld [vmem:[#allocation7] sm:$0xf]
    %v816 = vld [vmem:[#allocation7 + $0x4] sm:$0xf]
    %v817 = vld [vmem:[#allocation7 + $0x8] sm:$0xf]
    %v818 = vld [vmem:[#allocation7 + $0xc] sm:$0xf]
    %v819 = vld [vmem:[#allocation7 + $0x10] sm:$0xf]
    %v820 = vld [vmem:[#allocation7 + $0x14] sm:$0xf]
    %v821 = vld [vmem:[#allocation7 + $0x18] sm:$0xf]
    %v822 = vld [vmem:[#allocation7 + $0x1c] sm:$0xf]
    %v823 = vld [vmem:[#allocation7 + $0x20] sm:$0xf]
    %v824 = vld [vmem:[#allocation7 + $0x24] sm:$0xf]
    %v825 = vld [vmem:[#allocation7 + $0x28] sm:$0xf]
    %v826 = vld [vmem:[#allocation7 + $0x2c] sm:$0xf]
    %v827 = vld [vmem:[#allocation7 + $0x30] sm:$0xf]
    %v828 = vld [vmem:[#allocation7 + $0x34] sm:$0xf]
    %v829 = vld [vmem:[#allocation7 + $0x38] sm:$0xf]
    %v830 = vld [vmem:[#allocation7 + $0x3c] sm:$0xf]
    %v831 = vld [vmem:[%s6] sm:$0x1]
    %v833 = vlaneseq
    %v834 = vshrl.u32 %v833, 7
    %v835 = vsub.s32 0, %v834
    %v836 = vrot.slane %v831, %v835
    %v854 = vunpack.c.l.b16 %v815
    %v855 = vunpack.c.l.b16 %v816
    %v856 = vunpack.c.l.b16 %v817
    %v857 = vunpack.c.l.b16 %v818
    %v858 = vunpack.c.l.b16 %v819
    %v859 = vunpack.c.l.b16 %v820
    %v860 = vunpack.c.l.b16 %v821
    %v861 = vunpack.c.l.b16 %v822
    %v862 = vunpack.c.l.b16 %v823
    %v863 = vunpack.c.l.b16 %v824
    %v864 = vunpack.c.l.b16 %v825
    %v865 = vunpack.c.l.b16 %v826
    %v866 = vunpack.c.l.b16 %v827
    %v867 = vunpack.c.l.b16 %v828
    %v868 = vunpack.c.l.b16 %v829
    %v869 = vunpack.c.l.b16 %v830
    %v870 = vpack.c.b16 %v855, %v854
    %v871 = vpack.c.b16 %v857, %v856
    %v872 = vpack.c.b16 %v859, %v858
    %v873 = vpack.c.b16 %v861, %v860
    %v874 = vpack.c.b16 %v863, %v862
    %v875 = vpack.c.b16 %v865, %v864
    %v876 = vpack.c.b16 %v867, %v866
    %v877 = vpack.c.b16 %v869, %v868
    %886 = vmatprep.subr.bf16.mxu0 0
    %887 = vmatpush1.bf16.msra.mxu0 %v870
    %888 = vmatprep.subr.bf16.mxu0 0
    %889 = vmatpush1.bf16.msra.mxu0 %v871
    %890 = vmatprep.subr.bf16.mxu0 0
    %891 = vmatpush1.bf16.msra.mxu0 %v872
    %892 = vmatprep.subr.bf16.mxu0 0
    %893 = vmatpush1.bf16.msra.mxu0 %v873
    %894 = vmatprep.subr.bf16.mxu0 0
    %895 = vmatpush1.bf16.msra.mxu0 %v874
    %896 = vmatprep.subr.bf16.mxu0 0
    %897 = vmatpush1.bf16.msra.mxu0 %v875
    %898 = vmatprep.subr.bf16.mxu0 0
    %899 = vmatpush1.bf16.msra.mxu0 %v876
    %900 = vmatprep.subr.bf16.mxu0 0
    %901 = vmatpush1.bf16.msra.mxu0 %v877
    %902 = vmatprep.subr.bf16.mxu0 0
    %903 = vmatpush1.bf16.msra.mxu0 0
    %904 = vmatprep.subr.bf16.mxu0 0
    %905 = vmatpush1.bf16.msra.mxu0 0
    %906 = vmatprep.subr.bf16.mxu0 0
    %907 = vmatpush1.bf16.msra.mxu0 0
    %908 = vmatprep.subr.bf16.mxu0 0
    %909 = vmatpush1.bf16.msra.mxu0 0
    %910 = vmatprep.subr.bf16.mxu0 0
    %911 = vmatpush1.bf16.msra.mxu0 0
    %912 = vmatprep.subr.bf16.mxu0 0
    %913 = vmatpush1.bf16.msra.mxu0 0
    %914 = vmatprep.subr.bf16.mxu0 0
    %915 = vmatpush1.bf16.msra.mxu0 0
    %916 = vmatprep.subr.bf16.mxu0 0
    %917 = vmatpush1.bf16.msra.mxu0 0
    %918 = vmatprep.mubr.bf16.mxu0 0
    %919 = vmatmul.mubr.bf16.gmra.mrb[0].mxu0 %v814
    %v920 = vpop.f32.mrb[0].mxu0
    %v921 = vadd.f32 %v836, %v920
    %v922 = vpop.f32.mrb[0].mxu0
    %v923 = vpop.f32.mrb[0].mxu0
    %v924 = vadd.f32 %v836, %v923
    %v925 = vpop.f32.mrb[0].mxu0
    %926 = vdwg.mxu0
    %vm927 = vcmp.gt.f32.partialorder %v921, 0.0
    %vm928 = vcmp.gt.f32.partialorder %v924, 0.0
    %v929 = vmul.f32 %v921, 0.2
    %v930 = vmul.f32 %v924, 0.2
    %v931 = vsel %vm927, %v921, %v929
    %v932 = vsel %vm928, %v924, %v930
    %v933 = vpack.c.bf16 %v932, %v931
    %v934 = vld [vmem:[#allocation9] sm:$0xf]
    %v935 = vld [vmem:[#allocation9 + $0x4] sm:$0xf]
    %v936 = vld [vmem:[#allocation9 + $0x8] sm:$0xf]
    %v937 = vld [vmem:[#allocation9 + $0xc] sm:$0xf]
    %v938 = vld [vmem:[#allocation9 + $0x10] sm:$0xf]
    %v939 = vld [vmem:[#allocation9 + $0x14] sm:$0xf]
    %v940 = vld [vmem:[#allocation9 + $0x18] sm:$0xf]
    %v941 = vld [vmem:[#allocation9 + $0x1c] sm:$0xf]
    %v942 = vld [vmem:[#allocation9 + $0x20] sm:$0xf]
    %v943 = vld [vmem:[#allocation9 + $0x24] sm:$0xf]
    %v944 = vld [vmem:[#allocation9 + $0x28] sm:$0xf]
    %v945 = vld [vmem:[#allocation9 + $0x2c] sm:$0xf]
    %v946 = vld [vmem:[#allocation9 + $0x30] sm:$0xf]
    %v947 = vld [vmem:[#allocation9 + $0x34] sm:$0xf]
    %v948 = vld [vmem:[#allocation9 + $0x38] sm:$0xf]
    %v949 = vld [vmem:[#allocation9 + $0x3c] sm:$0xf]
    %v950 = vld [vmem:[%s8] sm:$0x1]
    %v952 = vlaneseq
    %v953 = vshrl.u32 %v952, 7
    %v954 = vsub.s32 0, %v953
    %v955 = vrot.slane %v950, %v954
    %v973 = vunpack.c.l.b16 %v934
    %v974 = vunpack.c.l.b16 %v935
    %v975 = vunpack.c.l.b16 %v936
    %v976 = vunpack.c.l.b16 %v937
    %v977 = vunpack.c.l.b16 %v938
    %v978 = vunpack.c.l.b16 %v939
    %v979 = vunpack.c.l.b16 %v940
    %v980 = vunpack.c.l.b16 %v941
    %v981 = vunpack.c.l.b16 %v942
    %v982 = vunpack.c.l.b16 %v943
    %v983 = vunpack.c.l.b16 %v944
    %v984 = vunpack.c.l.b16 %v945
    %v985 = vunpack.c.l.b16 %v946
    %v986 = vunpack.c.l.b16 %v947
    %v987 = vunpack.c.l.b16 %v948
    %v988 = vunpack.c.l.b16 %v949
    %v989 = vpack.c.b16 %v974, %v973
    %v990 = vpack.c.b16 %v976, %v975
    %v991 = vpack.c.b16 %v978, %v977
    %v992 = vpack.c.b16 %v980, %v979
    %v993 = vpack.c.b16 %v982, %v981
    %v994 = vpack.c.b16 %v984, %v983
    %v995 = vpack.c.b16 %v986, %v985
    %v996 = vpack.c.b16 %v988, %v987
    %1005 = vmatprep.subr.bf16.mxu0 0
    %1006 = vmatpush1.bf16.msra.mxu0 %v989
    %1007 = vmatprep.subr.bf16.mxu0 0
    %1008 = vmatpush1.bf16.msra.mxu0 %v990
    %1009 = vmatprep.subr.bf16.mxu0 0
    %1010 = vmatpush1.bf16.msra.mxu0 %v991
    %1011 = vmatprep.subr.bf16.mxu0 0
    %1012 = vmatpush1.bf16.msra.mxu0 %v992
    %1013 = vmatprep.subr.bf16.mxu0 0
    %1014 = vmatpush1.bf16.msra.mxu0 %v993
    %1015 = vmatprep.subr.bf16.mxu0 0
    %1016 = vmatpush1.bf16.msra.mxu0 %v994
    %1017 = vmatprep.subr.bf16.mxu0 0
    %1018 = vmatpush1.bf16.msra.mxu0 %v995
    %1019 = vmatprep.subr.bf16.mxu0 0
    %1020 = vmatpush1.bf16.msra.mxu0 %v996
    %1021 = vmatprep.subr.bf16.mxu0 0
    %1022 = vmatpush1.bf16.msra.mxu0 0
    %1023 = vmatprep.subr.bf16.mxu0 0
    %1024 = vmatpush1.bf16.msra.mxu0 0
    %1025 = vmatprep.subr.bf16.mxu0 0
    %1026 = vmatpush1.bf16.msra.mxu0 0
    %1027 = vmatprep.subr.bf16.mxu0 0
    %1028 = vmatpush1.bf16.msra.mxu0 0
    %1029 = vmatprep.subr.bf16.mxu0 0
    %1030 = vmatpush1.bf16.msra.mxu0 0
    %1031 = vmatprep.subr.bf16.mxu0 0
    %1032 = vmatpush1.bf16.msra.mxu0 0
    %1033 = vmatprep.subr.bf16.mxu0 0
    %1034 = vmatpush1.bf16.msra.mxu0 0
    %1035 = vmatprep.subr.bf16.mxu0 0
    %1036 = vmatpush1.bf16.msra.mxu0 0
    %1037 = vmatprep.mubr.bf16.mxu0 0
    %1038 = vmatmul.mubr.bf16.gmra.mrb[0].mxu0 %v933
    %v1039 = vpop.f32.mrb[0].mxu0
    %v1040 = vadd.f32 %v955, %v1039
    %v1041 = vpop.f32.mrb[0].mxu0
    %v1042 = vpop.f32.mrb[0].mxu0
    %v1043 = vadd.f32 %v955, %v1042
    %v1044 = vpop.f32.mrb[0].mxu0
    %1045 = vdwg.mxu0
    %vm1046 = vcmask 7168
    %1047 = vst.msk [vmem:[%s9] sm:$0xff] %vm1046, %v1040
    %1048 = vst.msk [vmem:[%s9 + $0x8] sm:$0xff] %vm1046, %v1043
    // Predicated region
    $region58: #{tpu_custom_call.1} parent=1 // pred_check
      _
    $region59: #{tpu_custom_call.1} parent=1 // pred_check_branch
      %1050 = sbr.rel (0) target = $region61
    $region60: #{tpu_custom_call.1} parent=1 // pred_region
      _
    $region61: #{tpu_custom_call.1} parent=1 // pred_fallthru
      _
    // Predicated region
    $region62: #{tpu_custom_call.1} parent=1 // pred_check
      _
    $region63: #{tpu_custom_call.1} parent=1 // pred_check_branch
      %1052 = sbr.rel (0) target = $region65
    $region64: #{tpu_custom_call.1} parent=1 // pred_region
      _
    $region65: #{tpu_custom_call.1} parent=1 // pred_fallthru
      _
    %1053 = vsyncpa [#allocation3], 1
    %1054 = vsyncpa [#allocation5], 1
    %1055 = vsyncpa [#allocation8], 1

</llo_original>
